<compile_context>
chip_gen: v7x
topology: tpu7x:2x2x1
jax: 0.10.0
libtpu: 0.0.40
codegen_flags: <defaults>
</compile_context>

<pallas_src>
import functools
import math

import jax
import jax.numpy as jnp
from jax import lax
from jax.experimental import pallas as pl
from jax.experimental.pallas import tpu as pltpu


def _round_up(x, m):
    return ((x + m - 1) // m) * m


def _matern_body(a_ref, b_ref, o_ref, *, nu, outputscale, lengthscale,
                 self_cov, tm, tn):
    """One (tm, tn) tile of the Matern covariance matrix.

    a_ref: (tm, D+2) tile of the augmented x1, b_ref: (tn, D+2) tile of the
    augmented x2, o_ref: (tm, tn).  Squared distances come straight off the
    MXU via the augmented contraction, then the Matern radial profile runs
    elementwise (VPU + EUP rsqrt/exp).
    """
    a = a_ref[...]                                             # (tm, D+2) f32
    b = b_ref[...]                                             # (tn, D+2) f32

    # dot(x1_aug, x2_aug^T) == |x1_i|^2 + |x2_j|^2 - 2 <x1_i, x2_j> == d2.
    d2 = lax.dot_general(a, b,
                         dimension_numbers=(((1,), (1,)), ((), ())),
                         preferred_element_type=jnp.float32)   # (tm, tn) MXU
    d2 = jnp.maximum(d2, 0.0)

    # r = sqrt(d2) via one EUP rsqrt push; tiny guard keeps d2 == 0 NaN-free.
    r = d2 * lax.rsqrt(jnp.maximum(d2, jnp.float32(1e-30)))

    s = jnp.float32(outputscale)
    if nu == 0.5:
        inv_l = jnp.float32(1.0 / lengthscale)
        k = s * jnp.exp(-r * inv_l)
    elif nu == 1.5:
        c = jnp.float32(math.sqrt(3.0) / lengthscale)
        cr = c * r
        k = s * (1.0 + cr) * jnp.exp(-cr)
    else:  # nu == 2.5
        c = jnp.float32(math.sqrt(5.0) / lengthscale)
        k2 = jnp.float32(5.0 / (3.0 * lengthscale * lengthscale))
        cr = c * r
        k = s * (1.0 + cr + k2 * d2) * jnp.exp(-cr)

    o_ref[...] = k.astype(o_ref.dtype)

    if self_cov:
        # Only tiles that intersect the global diagonal pay the mask cost.
        r0 = pl.program_id(0) * tm
        c0 = pl.program_id(1) * tn
        on_diag = jnp.logical_and(r0 < c0 + tn, c0 < r0 + tm)

        @pl.when(on_diag)
        def _():
            row = lax.broadcasted_iota(jnp.int32, (tm, tn), 0) + r0
            col = lax.broadcasted_iota(jnp.int32, (tm, tn), 1) + c0
            # r == 0 on the diagonal => prefactor = 1, exp = 1 => outputscale.
            o_ref[...] = jnp.where(row == col, s,
                                   o_ref[...].astype(jnp.float32)
                                   ).astype(o_ref.dtype)


def matern_kernel(x1, x2=None, *, outputscale, lengthscale, nu,
                  tm=512, tn=1024, out_dtype=jnp.float32):
    """Pallas-backed equivalent of MaternKernel(outputscale, lengthscale, nu)(x1, x2)."""
    assert nu in (0.5, 1.5, 2.5)
    self_cov = x2 is None
    if self_cov:
        x2 = x1

    x1 = jnp.asarray(x1, jnp.float32)
    x2 = jnp.asarray(x2, jnp.float32)
    M, D = x1.shape
    N, D2 = x2.shape
    assert D == D2

    # Tile sizes: clamp to dims (rounded up to the (8, 128) layout grain).
    tm = min(tm, _round_up(M, 8))
    tn = min(tn, _round_up(N, 128))
    # v7x megacore: keep at least one 'parallel' grid axis with >= 2 steps
    # when possible so the grid can be sharded across both TensorCores.
    if pl.cdiv(M, tm) == 1 and pl.cdiv(N, tn) == 1 and N > 128:
        tn = _round_up(pl.cdiv(N, 2), 128)

    # Augmented features so d2 comes straight off the MXU contraction:
    #   x1_aug = [-2*x1, |x1|^2, 1]   x2_aug = [x2, 1, |x2|^2]
    sq1 = jnp.sum(x1 * x1, axis=-1, keepdims=True)             # (M, 1)
    sq2 = jnp.sum(x2 * x2, axis=-1, keepdims=True)             # (N, 1)
    ones1 = jnp.ones((M, 1), jnp.float32)
    ones2 = jnp.ones((N, 1), jnp.float32)
    x1_aug = jnp.concatenate([-2.0 * x1, sq1, ones1], axis=-1)  # (M, D+2)
    x2_aug = jnp.concatenate([x2, ones2, sq2], axis=-1)         # (N, D+2)
    Da = D + 2

    kernel = functools.partial(
        _matern_body,
        nu=nu,
        outputscale=float(outputscale),
        lengthscale=float(lengthscale),
        self_cov=self_cov,
        tm=tm,
        tn=tn,
    )

    # cdiv grid + un-padded out_shape: Pallas masks partial-edge writeback,
    # so no pad / slice copy of the full (M, N) matrix is needed.
    return pl.pallas_call(
        kernel,
        out_shape=jax.ShapeDtypeStruct((M, N), out_dtype),
        grid_spec=pltpu.PrefetchScalarGridSpec(
            num_scalar_prefetch=0,
            grid=(pl.cdiv(M, tm), pl.cdiv(N, tn)),
            in_specs=[
                pl.BlockSpec((tm, Da), lambda i, j: (i, 0)),   # x1_aug row tile
                pl.BlockSpec((tn, Da), lambda i, j: (j, 0)),   # x2_aug col tile
            ],
            out_specs=pl.BlockSpec((tm, tn), lambda i, j: (i, j)),
        ),
        compiler_params=pltpu.CompilerParams(
            dimension_semantics=("parallel", "parallel"),
            vmem_limit_bytes=32 * 1024 * 1024,
        ),
    )(x1_aug, x2_aug)


def _matern_ref(x1, x2, *, outputscale, lengthscale, nu, zero_diag):
    """Pure-JAX reference mirroring the PyTorch semantics."""
    d2 = jnp.sum((x1[:, None, :] - x2[None, :, :]) ** 2, axis=-1)
    r = jnp.sqrt(jnp.maximum(d2, 0.0))
    if zero_diag:
        n = x1.shape[0]
        r = r * (1.0 - jnp.eye(n, dtype=r.dtype))
    l = lengthscale
    if nu == 0.5:
        k = outputscale * jnp.exp(-r / l)
    elif nu == 1.5:
        c = math.sqrt(3.0) / l
        k = outputscale * (1.0 + c * r) * jnp.exp(-c * r)
    else:
        c = math.sqrt(5.0) / l
        k = outputscale * (1.0 + c * r + 5.0 * r * r / (3.0 * l * l)) * jnp.exp(-c * r)
    return k.astype(jnp.float32)


if __name__ == "__main__":
    key = jax.random.PRNGKey(0)
    k1, k2, k3, k4 = jax.random.split(key, 4)

    outputscale = 1.5
    lengthscale = 0.7

    ok = True

    # Small square case.
    M, N, D = 64, 64, 8
    x1 = jax.random.normal(k1, (M, D), dtype=jnp.float32)
    x2 = jax.random.normal(k2, (N, D), dtype=jnp.float32)

    for nu in (0.5, 1.5, 2.5):
        # Cross-covariance case (x2 given).
        k_cross = matern_kernel(x1, x2, outputscale=outputscale,
                                lengthscale=lengthscale, nu=nu)
        k_cross = jax.block_until_ready(k_cross)
        ref_cross = _matern_ref(x1, x2, outputscale=outputscale,
                                lengthscale=lengthscale, nu=nu, zero_diag=False)
        ok &= bool(jnp.allclose(k_cross, ref_cross, atol=1e-4, rtol=1e-4))

        # Self-covariance case (x2 is None): diagonal == outputscale.
        k_self = matern_kernel(x1, None, outputscale=outputscale,
                               lengthscale=lengthscale, nu=nu)
        k_self = jax.block_until_ready(k_self)
        ref_self = _matern_ref(x1, x1, outputscale=outputscale,
                               lengthscale=lengthscale, nu=nu, zero_diag=True)
        ok &= bool(jnp.allclose(k_self, ref_self, atol=1e-4, rtol=1e-4))
        ok &= bool(jnp.allclose(jnp.diag(k_self),
                                jnp.full((M,), outputscale, jnp.float32),
                                atol=1e-5))

    # Rectangular / ragged case to exercise the cdiv grid + partial tiles.
    M2, N2 = 72, 200
    x1b = jax.random.normal(k3, (M2, D), dtype=jnp.float32)
    x2b = jax.random.normal(k4, (N2, D), dtype=jnp.float32)
    k_rect = matern_kernel(x1b, x2b, outputscale=outputscale,
                           lengthscale=lengthscale, nu=1.5)
    k_rect = jax.block_until_ready(k_rect)
    ref_rect = _matern_ref(x1b, x2b, outputscale=outputscale,
                           lengthscale=lengthscale, nu=1.5, zero_diag=False)
    ok &= bool(jnp.allclose(k_rect, ref_rect, atol=1e-4, rtol=1e-4))

    k_selfb = matern_kernel(x1b, None, outputscale=outputscale,
                            lengthscale=lengthscale, nu=2.5)
    k_selfb = jax.block_until_ready(k_selfb)
    ref_selfb = _matern_ref(x1b, x1b, outputscale=outputscale,
                            lengthscale=lengthscale, nu=2.5, zero_diag=True)
    ok &= bool(jnp.allclose(k_selfb, ref_selfb, atol=1e-4, rtol=1e-4))
    ok &= bool(jnp.allclose(jnp.diag(k_selfb),
                            jnp.full((M2,), outputscale, jnp.float32),
                            atol=1e-5))

    # Optional bf16-output path (math in f32, cast at the store).
    k_bf16 = matern_kernel(x1, x2, outputscale=outputscale,
                           lengthscale=lengthscale, nu=1.5,
                           out_dtype=jnp.bfloat16)
    k_bf16 = jax.block_until_ready(k_bf16)
    ref_bf16 = _matern_ref(x1, x2, outputscale=outputscale,
                           lengthscale=lengthscale, nu=1.5, zero_diag=False)
    ok &= bool(jnp.all(jnp.isfinite(k_bf16.astype(jnp.float32))))
    ok &= bool(jnp.allclose(k_bf16.astype(jnp.float32), ref_bf16,
                            atol=5e-2, rtol=5e-2))

    if ok:
        print("KERNEL_OK")
    else:
        print("KERNEL_MISMATCH")
</pallas_src>

<mosaic_0001>
module attributes {stable_mosaic.version = 11 : i64} {
  func.func @_matern_body(%arg0: i32, %arg1: i32, %arg2: memref<64x10xf32, #tpu.memory_space<vmem>>, %arg3: memref<128x10xf32, #tpu.memory_space<vmem>>, %arg4: memref<64x128xf32, #tpu.memory_space<vmem>>) attributes {dimension_semantics = [#tpu.dimension_semantics<parallel>, #tpu.dimension_semantics<parallel>], iteration_bounds = array<i64: 1, 1>, scalar_prefetch = 0 : i64, scratch_operands = 0 : i64, tpu.core_type = #tpu.core_type<tc>, window_params = [{transform_indices = @transform_0, window_bounds = array<i64: 64, 10>}, {transform_indices = @transform_1, window_bounds = array<i64: 128, 10>}, {transform_indices = @transform_2, window_bounds = array<i64: 64, 128>}]} {
    %c0 = arith.constant 0 : index
    %c0_0 = arith.constant 0 : index
    %0 = vector.load %arg2[%c0, %c0_0] : memref<64x10xf32, #tpu.memory_space<vmem>>, vector<64x10xf32>
    %c0_1 = arith.constant 0 : index
    %c0_2 = arith.constant 0 : index
    %1 = vector.load %arg3[%c0_1, %c0_2] : memref<128x10xf32, #tpu.memory_space<vmem>>, vector<128x10xf32>
    %cst = arith.constant dense<0.000000e+00> : vector<64x128xf32>
    %2 = tpu.matmul %0, %1, %cst {dimension_numbers = #tpu.dot_dimension_numbers<[1], [1], [0], [0], [0, 0, 1, 0], [], []>} : vector<64x10xf32>, vector<128x10xf32>, vector<64x128xf32> -> vector<64x128xf32>
    %cst_3 = arith.constant 0.000000e+00 : f32
    %3 = vector.broadcast %cst_3 : f32 to vector<64x128xf32>
    %4 = arith.maximumf %2, %3 : vector<64x128xf32>
    %cst_4 = arith.constant 1.000000e-30 : f32
    %5 = vector.broadcast %cst_4 : f32 to vector<64x128xf32>
    %6 = arith.maximumf %4, %5 : vector<64x128xf32>
    %7 = math.rsqrt %6 : vector<64x128xf32>
    %8 = arith.mulf %4, %7 : vector<64x128xf32>
    %cst_5 = arith.constant 0.000000e+00 : f32
    %9 = vector.broadcast %cst_5 : f32 to vector<64x128xf32>
    %10 = arith.subf %9, %8 : vector<64x128xf32>
    %cst_6 = arith.constant 1.42857146 : f32
    %11 = vector.broadcast %cst_6 : f32 to vector<64x128xf32>
    %12 = arith.mulf %10, %11 : vector<64x128xf32>
    %13 = math.exp %12 : vector<64x128xf32>
    %cst_7 = arith.constant 1.500000e+00 : f32
    %14 = vector.broadcast %cst_7 : f32 to vector<64x128xf32>
    %15 = arith.mulf %14, %13 : vector<64x128xf32>
    %c0_8 = arith.constant 0 : index
    %c0_9 = arith.constant 0 : index
    %16 = vector.load %arg4[%c0_8, %c0_9] : memref<64x128xf32, #tpu.memory_space<vmem>>, vector<64x128xf32>
    tpu.vector_store %arg4[%c0_8, %c0_9], %15 {strides = array<i32>} : memref<64x128xf32, #tpu.memory_space<vmem>>, vector<64x128xf32>,
    return
  }
  func.func @transform_0(%arg0: i32, %arg1: i32) -> (i32, i32) {
    %c0_i32 = arith.constant 0 : i32
    %c0_i32_0 = arith.constant 0 : i32
    return %arg0, %c0_i32 : i32, i32
  }
  func.func @transform_1(%arg0: i32, %arg1: i32) -> (i32, i32) {
    %c0_i32 = arith.constant 0 : i32
    %c0_i32_0 = arith.constant 0 : i32
    return %arg1, %c0_i32 : i32, i32
  }
  func.func @transform_2(%arg0: i32, %arg1: i32) -> (i32, i32) {
    %c0_i32 = arith.constant 0 : i32
    return %arg0, %arg1 : i32, i32
  }
}

</mosaic_0001>

<llo_original>
// kernel: tpu_custom_call.1
$region0: #{tpu_custom_call.1}
  #allocation0 [shape = 'u32[]', space=smem, size = 0x4, offset = 0x4, fixed_abs, tag = 'smem constant byte address 0x4 - core index']
  #allocation1 [shape = 'u32[144,128]{1,0:T(1,128)}', space=vmem, size = 0x12000, scoped, tag = 'internal scratch']
  %s0 = inlined_call_operand.vmem [shape: f32[64,10], index: 0, kind: input, shape index: {}]
  %s1 = inlined_call_operand.vmem [shape: f32[64,10], index: 1, kind: input, shape index: {}]
  %s2 = inlined_call_operand.hbm [shape: f32[64,64], index: 2, kind: output, shape index: {}]
  %s3 = sld [smem:[#allocation0]]
  $region18: #{tpu_custom_call.1} parent=0
    _
  %s5 = ssub.s32 1, %s3
  %s6 = scalar_select 0, %s5, %s3
  $region1: #{tpu_custom_call.1} parent=0
    #allocation2 [shape = 'u8[32768]{0}', space=vmem, size = 0x8000, scoped, tag = 'output window, operand 0, single buffered']
    #allocation3 [shape = 's32[1]{0}', space=sflag, size = 0x4, scoped, tag = 'scoped memory for tpu_custom_call.1']
    %7 = vsyncpa [#allocation3], 0
    // Predicated region
    $region2: #{tpu_custom_call.1} parent=1 // pred_check
      _
    $region3: #{tpu_custom_call.1} parent=1 // pred_check_branch
      %9 = sbr.rel (0) target = $region5
    $region4: #{tpu_custom_call.1} parent=1 // pred_region
      _
    $region5: #{tpu_custom_call.1} parent=1 // pred_fallthru
      _
    // Predicated region
    $region6: #{tpu_custom_call.1} parent=1 // pred_check
      _
    $region7: #{tpu_custom_call.1} parent=1 // pred_check_branch
      %11 = sbr.rel (0) target = $region9
    $region8: #{tpu_custom_call.1} parent=1 // pred_region
      _
    $region9: #{tpu_custom_call.1} parent=1 // pred_fallthru
      _
    %v12 = vld [vmem:[%s0] sm:$0xff]
    %v13 = vld [vmem:[%s0 + $0x8] sm:$0xff]
    %v14 = vld [vmem:[%s0 + $0x10] sm:$0xff]
    %v15 = vld [vmem:[%s0 + $0x18] sm:$0xff]
    %v16 = vld [vmem:[%s0 + $0x20] sm:$0xff]
    %v17 = vld [vmem:[%s0 + $0x28] sm:$0xff]
    %v18 = vld [vmem:[%s0 + $0x30] sm:$0xff]
    %v19 = vld [vmem:[%s0 + $0x38] sm:$0xff]
    %v20 = vld [vmem:[%s1] sm:$0xff]
    %v21 = vld [vmem:[%s1 + $0x8] sm:$0xff]
    %v22 = vld [vmem:[%s1 + $0x10] sm:$0xff]
    %v23 = vld [vmem:[%s1 + $0x18] sm:$0xff]
    %v24 = vld [vmem:[%s1 + $0x20] sm:$0xff]
    %v25 = vld [vmem:[%s1 + $0x28] sm:$0xff]
    %v26 = vld [vmem:[%s1 + $0x30] sm:$0xff]
    %v27 = vld [vmem:[%s1 + $0x38] sm:$0xff]
    %v28 = vld [vmem:[%s1 + $0x40] sm:$0xff]
    %v29 = vld [vmem:[%s1 + $0x48] sm:$0xff]
    %v30 = vld [vmem:[%s1 + $0x50] sm:$0xff]
    %v31 = vld [vmem:[%s1 + $0x58] sm:$0xff]
    %v32 = vld [vmem:[%s1 + $0x60] sm:$0xff]
    %v33 = vld [vmem:[%s1 + $0x68] sm:$0xff]
    %v34 = vld [vmem:[%s1 + $0x70] sm:$0xff]
    %v35 = vld [vmem:[%s1 + $0x78] sm:$0xff]
    %vm36 = vcmask 80896
    %v38 = vsel %vm36, %v12, 0
    %v41 = vsel %vm36, %v13, 0
    %v44 = vsel %vm36, %v14, 0
    %v47 = vsel %vm36, %v15, 0
    %v50 = vsel %vm36, %v16, 0
    %v53 = vsel %vm36, %v17, 0
    %v56 = vsel %vm36, %v18, 0
    %v59 = vsel %vm36, %v19, 0
    %v62 = vsel %vm36, %v20, 0
    %v65 = vsel %vm36, %v21, 0
    %v68 = vsel %vm36, %v22, 0
    %v71 = vsel %vm36, %v23, 0
    %v74 = vsel %vm36, %v24, 0
    %v77 = vsel %vm36, %v25, 0
    %v80 = vsel %vm36, %v26, 0
    %v83 = vsel %vm36, %v27, 0
    %v86 = vsel %vm36, %v28, 0
    %v89 = vsel %vm36, %v29, 0
    %v92 = vsel %vm36, %v30, 0
    %v95 = vsel %vm36, %v31, 0
    %v98 = vsel %vm36, %v32, 0
    %v101 = vsel %vm36, %v33, 0
    %v104 = vsel %vm36, %v34, 0
    %v107 = vsel %vm36, %v35, 0
    %109 = vmatprep.subr.mxu0 0.0
    %110 = vmatpush1.xpose.msra.mxu0 %v62
    %111 = vmatprep.subr.mxu0 0.0
    %112 = vmatpush1.xpose.msra.mxu0 %v65
    %113 = vmatprep.subr.mxu0 0.0
    %114 = vmatpush1.xpose.msra.mxu0 %v68
    %115 = vmatprep.subr.mxu0 0.0
    %116 = vmatpush1.xpose.msra.mxu0 %v71
    %117 = vmatprep.subr.mxu0 0.0
    %118 = vmatpush1.xpose.msra.mxu0 %v74
    %119 = vmatprep.subr.mxu0 0.0
    %120 = vmatpush1.xpose.msra.mxu0 %v77
    %121 = vmatprep.subr.mxu0 0.0
    %122 = vmatpush1.xpose.msra.mxu0 %v80
    %123 = vmatprep.subr.mxu0 0.0
    %124 = vmatpush1.xpose.msra.mxu0 %v83
    %125 = vmatprep.subr.mxu0 0.0
    %126 = vmatpush1.xpose.msra.mxu0 %v86
    %127 = vmatprep.subr.mxu0 0.0
    %128 = vmatpush1.xpose.msra.mxu0 %v89
    %129 = vmatprep.subr.mxu0 0.0
    %130 = vmatpush1.xpose.msra.mxu0 %v92
    %131 = vmatprep.subr.mxu0 0.0
    %132 = vmatpush1.xpose.msra.mxu0 %v95
    %133 = vmatprep.subr.mxu0 0.0
    %134 = vmatpush1.xpose.msra.mxu0 %v98
    %135 = vmatprep.subr.mxu0 0.0
    %136 = vmatpush1.xpose.msra.mxu0 %v101
    %137 = vmatprep.subr.mxu0 0.0
    %138 = vmatpush1.xpose.msra.mxu0 %v104
    %139 = vmatprep.subr.mxu0 0.0
    %140 = vmatpush1.xpose.msra.mxu0 %v107
    %141 = vmatprep.subr.mxu0 0.0
    %142 = vmatpush1.xpose.msra.mxu0 0.0
    %143 = vmatprep.subr.mxu0 0.0
    %144 = vmatpush1.xpose.msra.mxu0 0.0
    %145 = vmatprep.subr.mxu0 0.0
    %146 = vmatpush1.xpose.msra.mxu0 0.0
    %147 = vmatprep.subr.mxu0 0.0
    %148 = vmatpush1.xpose.msra.mxu0 0.0
    %149 = vmatprep.subr.mxu0 0.0
    %150 = vmatpush1.xpose.msra.mxu0 0.0
    %151 = vmatprep.subr.mxu0 0.0
    %152 = vmatpush1.xpose.msra.mxu0 0.0
    %153 = vmatprep.subr.mxu0 0.0
    %154 = vmatpush1.xpose.msra.mxu0 0.0
    %155 = vmatprep.subr.mxu0 0.0
    %156 = vmatpush1.xpose.msra.mxu0 0.0
    %157 = vmatprep.subr.mxu0 0.0
    %158 = vmatpush1.xpose.msra.mxu0 0.0
    %159 = vmatprep.subr.mxu0 0.0
    %160 = vmatpush1.xpose.msra.mxu0 0.0
    %161 = vmatprep.subr.mxu0 0.0
    %162 = vmatpush1.xpose.msra.mxu0 0.0
    %163 = vmatprep.subr.mxu0 0.0
    %164 = vmatpush1.xpose.msra.mxu0 0.0
    %165 = vmatprep.subr.mxu0 0.0
    %166 = vmatpush1.xpose.msra.mxu0 0.0
    %167 = vmatprep.subr.mxu0 0.0
    %168 = vmatpush1.xpose.msra.mxu0 0.0
    %169 = vmatprep.subr.mxu0 0.0
    %170 = vmatpush1.xpose.msra.mxu0 0.0
    %171 = vmatprep.subr.mxu0 0.0
    %172 = vmatpush1.xpose.msra.mxu0 0.0
    %173 = vmatprep.mubr.f32.mxu0 0.0
    %174 = vmatmul.mubr.f32.gmra.mrb[0].mxu0 %v38
    %v175 = vpop.f32.mrb[0].mxu0
    %v176 = vadd.f32 0.0, %v175
    %v177 = vpop.f32.mrb[0].mxu0
    %178 = vmatprep.mubr.f32.mxu0 0.0
    %179 = vmatmul.mubr.f32.gmra.mrb[0].mxu0 %v41
    %v180 = vpop.f32.mrb[0].mxu0
    %v181 = vadd.f32 0.0, %v180
    %v182 = vpop.f32.mrb[0].mxu0
    %183 = vmatprep.mubr.f32.mxu0 0.0
    %184 = vmatmul.mubr.f32.gmra.mrb[0].mxu0 %v44
    %v185 = vpop.f32.mrb[0].mxu0
    %v186 = vadd.f32 0.0, %v185
    %v187 = vpop.f32.mrb[0].mxu0
    %188 = vmatprep.mubr.f32.mxu0 0.0
    %189 = vmatmul.mubr.f32.gmra.mrb[0].mxu0 %v47
    %v190 = vpop.f32.mrb[0].mxu0
    %v191 = vadd.f32 0.0, %v190
    %v192 = vpop.f32.mrb[0].mxu0
    %193 = vmatprep.mubr.f32.mxu0 0.0
    %194 = vmatmul.mubr.f32.gmra.mrb[0].mxu0 %v50
    %v195 = vpop.f32.mrb[0].mxu0
    %v196 = vadd.f32 0.0, %v195
    %v197 = vpop.f32.mrb[0].mxu0
    %198 = vmatprep.mubr.f32.mxu0 0.0
    %199 = vmatmul.mubr.f32.gmra.mrb[0].mxu0 %v53
    %v200 = vpop.f32.mrb[0].mxu0
    %v201 = vadd.f32 0.0, %v200
    %v202 = vpop.f32.mrb[0].mxu0
    %203 = vmatprep.mubr.f32.mxu0 0.0
    %204 = vmatmul.mubr.f32.gmra.mrb[0].mxu0 %v56
    %v205 = vpop.f32.mrb[0].mxu0
    %v206 = vadd.f32 0.0, %v205
    %v207 = vpop.f32.mrb[0].mxu0
    %208 = vmatprep.mubr.f32.mxu0 0.0
    %209 = vmatmul.mubr.f32.gmra.mrb[0].mxu0 %v59
    %v210 = vpop.f32.mrb[0].mxu0
    %v211 = vadd.f32 0.0, %v210
    %v212 = vpop.f32.mrb[0].mxu0
    %213 = vdwg.mxu0
    %v214 = vmax.f32 %v176, 0.0
    %v215 = vmax.f32 %v181, 0.0
    %v216 = vmax.f32 %v186, 0.0
    %v217 = vmax.f32 %v191, 0.0
    %v218 = vmax.f32 %v196, 0.0
    %v219 = vmax.f32 %v201, 0.0
    %v220 = vmax.f32 %v206, 0.0
    %v221 = vmax.f32 %v211, 0.0
    %v222 = vmax.f32 %v214, 1e-30
    %v223 = vmax.f32 %v215, 1e-30
    %v224 = vmax.f32 %v216, 1e-30
    %v225 = vmax.f32 %v217, 1e-30
    %v226 = vmax.f32 %v218, 1e-30
    %v227 = vmax.f32 %v219, 1e-30
    %v228 = vmax.f32 %v220, 1e-30
    %v229 = vmax.f32 %v221, 1e-30
    %v230 = vrsqrt.pop %v222
    %v231 = vrsqrt.pop %v223
    %v232 = vrsqrt.pop %v224
    %v233 = vrsqrt.pop %v225
    %v234 = vrsqrt.pop %v226
    %v235 = vrsqrt.pop %v227
    %v236 = vrsqrt.pop %v228
    %v237 = vrsqrt.pop %v229
    %v238 = vmul.f32 %v214, %v230
    %v239 = vmul.f32 %v215, %v231
    %v240 = vmul.f32 %v216, %v232
    %v241 = vmul.f32 %v217, %v233
    %v242 = vmul.f32 %v218, %v234
    %v243 = vmul.f32 %v219, %v235
    %v244 = vmul.f32 %v220, %v236
    %v245 = vmul.f32 %v221, %v237
    %v246 = vsub.f32 0.0, %v238
    %v247 = vsub.f32 0.0, %v239
    %v248 = vsub.f32 0.0, %v240
    %v249 = vsub.f32 0.0, %v241
    %v250 = vsub.f32 0.0, %v242
    %v251 = vsub.f32 0.0, %v243
    %v252 = vsub.f32 0.0, %v244
    %v253 = vsub.f32 0.0, %v245
    %v254 = vmul.f32 %v246, 1.4285715
    %v255 = vmul.f32 %v247, 1.4285715
    %v256 = vmul.f32 %v248, 1.4285715
    %v257 = vmul.f32 %v249, 1.4285715
    %v258 = vmul.f32 %v250, 1.4285715
    %v259 = vmul.f32 %v251, 1.4285715
    %v260 = vmul.f32 %v252, 1.4285715
    %v261 = vmul.f32 %v253, 1.4285715
    %v262 = vmul.f32 %v254, 1.442695
    %v263 = vpow.pop %v262
    %v264 = vmul.f32 %v255, 1.442695
    %v265 = vpow.pop %v264
    %v266 = vmul.f32 %v256, 1.442695
    %v267 = vpow.pop %v266
    %v268 = vmul.f32 %v257, 1.442695
    %v269 = vpow.pop %v268
    %v270 = vmul.f32 %v258, 1.442695
    %v271 = vpow.pop %v270
    %v272 = vmul.f32 %v259, 1.442695
    %v273 = vpow.pop %v272
    %v274 = vmul.f32 %v260, 1.442695
    %v275 = vpow.pop %v274
    %v276 = vmul.f32 %v261, 1.442695
    %v277 = vpow.pop %v276
    %v278 = vmul.f32 %v263, 1.5
    %v279 = vmul.f32 %v265, 1.5
    %v280 = vmul.f32 %v267, 1.5
    %v281 = vmul.f32 %v269, 1.5
    %v282 = vmul.f32 %v271, 1.5
    %v283 = vmul.f32 %v273, 1.5
    %v284 = vmul.f32 %v275, 1.5
    %v285 = vmul.f32 %v277, 1.5
    %286 = vst [vmem:[#allocation2] sm:$0xff] %v278
    %287 = vst [vmem:[#allocation2 + $0x8] sm:$0xff] %v279
    %288 = vst [vmem:[#allocation2 + $0x10] sm:$0xff] %v280
    %289 = vst [vmem:[#allocation2 + $0x18] sm:$0xff] %v281
    %290 = vst [vmem:[#allocation2 + $0x20] sm:$0xff] %v282
    %291 = vst [vmem:[#allocation2 + $0x28] sm:$0xff] %v283
    %292 = vst [vmem:[#allocation2 + $0x30] sm:$0xff] %v284
    %293 = vst [vmem:[#allocation2 + $0x38] sm:$0xff] %v285
    // Predicated region
    $region10: #{tpu_custom_call.1} parent=1 // pred_check
      _
    $region11: #{tpu_custom_call.1} parent=1 // pred_check_branch
      %295 = sbr.rel (0) target = $region13
    $region12: #{tpu_custom_call.1} parent=1 // pred_region
      %s297 = ssub.s32 1024, 1024
      %298 = vsyncadd [#allocation3], %s297
      %s299 = sshll.u32 [#allocation2], 4
      %s300 = int_to_ptr.vmem [resolvable:$true] %s299
      %305 = dma.vmem_to_hbm [thread:$0]  %s300, 1024, %s2, [#allocation3], 128, 128, 8
    $region13: #{tpu_custom_call.1} parent=1 // pred_fallthru
      _
    // Predicated region
    $region14: #{tpu_custom_call.1} parent=1 // pred_check
      _
    $region15: #{tpu_custom_call.1} parent=1 // pred_check_branch
      %307 = sbr.rel (0) target = $region17
    $region16: #{tpu_custom_call.1} parent=1 // pred_region
      %308 = dma.done [#allocation3], 1024
    $region17: #{tpu_custom_call.1} parent=1 // pred_fallthru
      _
    %309 = vsyncpa [#allocation3], 1

</llo_original>
